<compile_context>
chip_gen: v5e
topology: v5e:2x2
jax: 0.10.0
libtpu: 0.0.40
codegen_flags: <defaults>
</compile_context>

<pallas_src>
import functools

import jax
import jax.numpy as jnp
from jax.experimental import pallas as pl
from jax.experimental.pallas import tpu as pltpu


def _raloss_kernel(max_ref, org_ref, out_ref, *, scale):
    """max_ref / org_ref: (N, B) blocks in VMEM; out_ref: (1,) scalar in SMEM."""
    # f32 upcast before exp (required on v5e, harmless elsewhere).
    diff = org_ref[...].astype(jnp.float32) - max_ref[...].astype(jnp.float32)  # VPU
    total = jnp.sum(jnp.exp(diff))                                              # EUP + XLU
    out_ref[0] = total * jnp.float32(scale)                                     # scalar store


def raloss(alphas_max, alphas_org):
    """alphas_max / alphas_org: lists (length N) of (B,) arrays."""
    n_regions = len(alphas_org)
    batch_size = alphas_org[0].shape[0]
    scale = 10.0 / float(batch_size)                 # folded constant (trace time)

    # Stack into two (N, B) arrays: regions on sublanes, batch on lanes.
    max_stk = jnp.stack(alphas_max, axis=0)
    org_stk = jnp.stack(alphas_org, axis=0)

    itemsize = jnp.dtype(org_stk.dtype).itemsize
    cost = pl.CostEstimate(
        flops=3 * n_regions * batch_size,
        transcendentals=n_regions * batch_size,
        bytes_accessed=2 * n_regions * batch_size * itemsize + 4,
    )

    kernel = functools.partial(_raloss_kernel, scale=scale)

    out = pl.pallas_call(
        kernel,
        out_shape=jax.ShapeDtypeStruct((1,), jnp.float32),
        in_specs=[
            pl.BlockSpec(memory_space=pltpu.MemorySpace.VMEM),
            pl.BlockSpec(memory_space=pltpu.MemorySpace.VMEM),
        ],
        out_specs=pl.BlockSpec(memory_space=pltpu.MemorySpace.SMEM),
        cost_estimate=cost,
    )(max_stk, org_stk)

    # Shape (1,), matching torch's broadcasted torch.Tensor([10]) result.
    return out


if __name__ == "__main__":
    key = jax.random.PRNGKey(0)
    n_regions = 3     # length of the alphas lists (e.g. 3 attention regions)
    batch = 8         # batch size

    keys = jax.random.split(key, 2 * n_regions)
    alphas_max = [
        jax.random.normal(keys[i], (batch,), dtype=jnp.float32)
        for i in range(n_regions)
    ]
    alphas_org = [
        jax.random.normal(keys[n_regions + i], (batch,), dtype=jnp.float32)
        for i in range(n_regions)
    ]

    loss = raloss(alphas_max, alphas_org)
    jax.block_until_ready(loss)

    # Pure-JAX reference for the same math.
    ref = jnp.zeros((1,), jnp.float32)
    for i in range(n_regions):
        ref = ref + jnp.mean(10.0 * jnp.exp(alphas_org[i] - alphas_max[i]))
    assert loss.shape == (1,), loss.shape
    assert jnp.allclose(loss, ref, rtol=1e-5, atol=1e-5), (loss, ref)

    print("KERNEL_OK")
</pallas_src>

<mosaic_0001>
module attributes {stable_mosaic.version = 11 : i64} {
  func.func @_raloss_kernel(%arg0: memref<3x8xf32, #tpu.memory_space<vmem>>, %arg1: memref<3x8xf32, #tpu.memory_space<vmem>>, %arg2: memref<1xf32, #tpu.memory_space<smem>>) attributes {dimension_semantics = [], scalar_prefetch = 0 : i64, scratch_operands = 0 : i64, tpu.core_type = #tpu.core_type<tc>} {
    %c0 = arith.constant 0 : index
    %c0_0 = arith.constant 0 : index
    %0 = vector.load %arg1[%c0, %c0_0] : memref<3x8xf32, #tpu.memory_space<vmem>>, vector<3x8xf32>
    %c0_1 = arith.constant 0 : index
    %c0_2 = arith.constant 0 : index
    %1 = vector.load %arg0[%c0_1, %c0_2] : memref<3x8xf32, #tpu.memory_space<vmem>>, vector<3x8xf32>
    %2 = arith.subf %0, %1 : vector<3x8xf32>
    %3 = math.exp %2 : vector<3x8xf32>
    %4 = vector.shape_cast %3 : vector<3x8xf32> to vector<1x3x8xf32>
    %cst = arith.constant dense<0.000000e+00> : vector<1xf32>
    %5 = vector.multi_reduction <add>, %4, %cst [1, 2] : vector<1x3x8xf32> to vector<1xf32>
    %6 = vector.shape_cast %5 : vector<1xf32> to vector<1x1x1xf32>
    %7 = vector.extract %6[0, 0, 0] : f32 from vector<1x1x1xf32>
    %cst_3 = arith.constant 1.250000e+00 : f32
    %8 = arith.mulf %7, %cst_3 : f32
    %c0_4 = arith.constant 0 : index
    %9 = memref.load %arg2[%c0_4] : memref<1xf32, #tpu.memory_space<smem>>
    memref.store %8, %arg2[%c0_4] : memref<1xf32, #tpu.memory_space<smem>>
    return
  }
}

</mosaic_0001>

<llo_original>
// kernel: tpu_custom_call.1
$region0: #{tpu_custom_call.1}
  #allocation0 [shape = 'u32[]', space=smem, size = 0x4, offset = 0x4, fixed_abs, tag = 'smem constant byte address 0x4 - core index']
  #allocation1 [shape = 'u32[72,128]{1,0:T(1,128)}', space=vmem, size = 0x9000, scoped, tag = 'internal scratch']
  %s0 = inlined_call_operand.hbm [shape: f32[3,8], index: 0, kind: input, shape index: {}]
  %s1 = inlined_call_operand.hbm [shape: f32[3,8], index: 1, kind: input, shape index: {}]
  %s2 = inlined_call_operand.hbm [shape: f32[1], index: 2, kind: output, shape index: {}]
  %s3 = sld [smem:[#allocation0]]
  $region26: #{tpu_custom_call.1} parent=0
    _
  %s5 = ssub.s32 1, %s3
  %s6 = scalar_select 0, %s5, %s3
  $region1: #{tpu_custom_call.1} parent=0
    #allocation2 [shape = 'u8[2048]{0}', space=vmem, size = 0x800, scoped, tag = 'input window, operand 0, single buffered']
    #allocation3 [shape = 's32[1]{0}', space=sflag, size = 0x4, scoped, tag = 'scoped memory for tpu_custom_call.1']
    #allocation4 [shape = 's32[1]{0}', space=sflag, size = 0x4, scoped, tag = 'scoped memory for tpu_custom_call.1']
    #allocation5 [shape = 'u8[2048]{0}', space=vmem, size = 0x800, scoped, tag = 'input window, operand 1, single buffered']
    #allocation6 [shape = 's32[1]{0}', space=sflag, size = 0x4, scoped, tag = 'scoped memory for tpu_custom_call.1']
    #allocation7 [shape = 'u8[512]{0}', space=smem, size = 0x200, scoped, tag = 'output window, operand 0, single buffered']
    %7 = vsyncpa [#allocation3], 0
    %8 = vsyncpa [#allocation6], 0
    %9 = vsyncpa [#allocation4], 0
    // Predicated region
    $region2: #{tpu_custom_call.1} parent=1 // pred_check
      _
    $region3: #{tpu_custom_call.1} parent=1 // pred_check_branch
      %11 = sbr.rel (0) target = $region5
    $region4: #{tpu_custom_call.1} parent=1 // pred_region
      %13 = vsyncadd [#allocation3], 0
      %s15 = sshll.u32 %s0, 4
      %s16 = int_to_ptr.hbm [resolvable:$true] %s15
      %s17 = sshll.u32 [#allocation2], 4
      %s18 = int_to_ptr.vmem [resolvable:$true] %s17
      %20 = dma.hbm_to_vmem [thread:$0]  %s16, 64, %s18, [#allocation3]
    $region5: #{tpu_custom_call.1} parent=1 // pred_fallthru
      _
    // Predicated region
    $region6: #{tpu_custom_call.1} parent=1 // pred_check
      _
    $region7: #{tpu_custom_call.1} parent=1 // pred_check_branch
      %22 = sbr.rel (0) target = $region9
    $region8: #{tpu_custom_call.1} parent=1 // pred_region
      %24 = vsyncadd [#allocation6], 0
      %s26 = sshll.u32 %s1, 4
      %s27 = int_to_ptr.hbm [resolvable:$true] %s26
      %s28 = sshll.u32 [#allocation5], 4
      %s29 = int_to_ptr.vmem [resolvable:$true] %s28
      %31 = dma.hbm_to_vmem [thread:$0]  %s27, 64, %s29, [#allocation6]
    $region9: #{tpu_custom_call.1} parent=1 // pred_fallthru
      _
    // Predicated region
    $region10: #{tpu_custom_call.1} parent=1 // pred_check
      _
    $region11: #{tpu_custom_call.1} parent=1 // pred_check_branch
      %33 = sbr.rel (0) target = $region13
    $region12: #{tpu_custom_call.1} parent=1 // pred_region
      %35 = dma.done [#allocation3], 64
    $region13: #{tpu_custom_call.1} parent=1 // pred_fallthru
      _
    // Predicated region
    $region14: #{tpu_custom_call.1} parent=1 // pred_check
      _
    $region15: #{tpu_custom_call.1} parent=1 // pred_check_branch
      %37 = sbr.rel (0) target = $region17
    $region16: #{tpu_custom_call.1} parent=1 // pred_region
      %39 = dma.done [#allocation6], 64
    $region17: #{tpu_custom_call.1} parent=1 // pred_fallthru
      _
    %v40 = vld [vmem:[#allocation5] sm:$0x7]
    %v41 = vld [vmem:[#allocation2] sm:$0x7]
    %v42 = vsub.f32 %v40, %v41
    %v43 = vmul.f32 %v42, 1.442695
    %v44 = vpow.pop %v43
    %vm45 = vcmask 59392
    %v46 = vsel %vm45, %v44, 0.0
    %47 = vadd.xlane.f32.xlu0 %v46
    %v48 = vpop.xlane.xlu0 %47
    %v49 = vrot.slane %v48, 4
    %v50 = vadd.f32 %v48, %v49
    %v51 = vrot.slane %v50, 2
    %v52 = vadd.f32 %v50, %v51
    %v53 = vrot.slane %v52, 1
    %v54 = vadd.f32 %v52, %v53
    %s55 = vtos %v54
    %s56 = smul.f32 %s55, 1.25
    %s57 = scalar_lea.smem [#allocation7], 0
    %58 = sst [smem:[%s57]] %s56
    // Predicated region
    $region18: #{tpu_custom_call.1} parent=1 // pred_check
      _
    $region19: #{tpu_custom_call.1} parent=1 // pred_check_branch
      %60 = sbr.rel (0) target = $region21
    $region20: #{tpu_custom_call.1} parent=1 // pred_region
      %62 = vsyncadd [#allocation4], 0
      %s64 = sshll.u32 %s2, 4
      %s65 = int_to_ptr.hbm [resolvable:$true] %s64
      %67 = dma.smem_to_hbm [#allocation7], 16, %s65, [#allocation4]
    $region21: #{tpu_custom_call.1} parent=1 // pred_fallthru
      _
    // Predicated region
    $region22: #{tpu_custom_call.1} parent=1 // pred_check
      _
    $region23: #{tpu_custom_call.1} parent=1 // pred_check_branch
      %69 = sbr.rel (0) target = $region25
    $region24: #{tpu_custom_call.1} parent=1 // pred_region
      %71 = dma.done [#allocation4], 16
    $region25: #{tpu_custom_call.1} parent=1 // pred_fallthru
      _
    %72 = sfence
    %73 = vsyncpa [#allocation3], 1
    %74 = vsyncpa [#allocation6], 1
    %75 = vsyncpa [#allocation4], 1

</llo_original>
